<compile_context>
chip_gen: v7x
topology: tpu7x:2x2x1
jax: 0.10.0
libtpu: 0.0.40
codegen_flags: <defaults>
</compile_context>

<pallas_src>
import functools

import jax
import jax.numpy as jnp
from jax.experimental import pallas as pl
from jax.experimental.pallas import tpu as pltpu


def _round_up(n, m):
    return ((n + m - 1) // m) * m


def pack_params(params):
    """Pack all Linear weights/biases into one f32 slab (done once, at init).

    params: list of (W, b) in PyTorch nn.Linear layout, W (out, in), b (out,).
    Hidden-layer weights are stored pre-transposed as (in, out) so the kernel
    computes h @ W + b directly on the MXU.  The final layer (OUTPUT_DIM == 1)
    weight is stored as a single (1, in) row for the VPU mul + lane-reduce path.
    Each section starts on an 8-row (sublane) boundary so in-kernel static
    slices are tile-aligned.

    Returns (slab, meta); meta is a hashable tuple of static row offsets/dims.
    """
    *hidden, (w_last, b_last) = params
    assert w_last.shape[0] == 1, "kernel specializes the final layer to OUTPUT_DIM == 1"

    width = max([w.shape[0] for w, _ in hidden] + [w_last.shape[1]])

    sections = []
    row = 0

    def _add(arr2d):
        nonlocal row
        off = row
        sections.append((off, jnp.asarray(arr2d, jnp.float32)))
        row += _round_up(arr2d.shape[0], 8)
        return off

    layers_meta = []
    for w, b in hidden:
        in_d, out_d = w.shape[1], w.shape[0]
        w_off = _add(w.T)            # (in, out)
        b_off = _add(b[None, :])     # (1, out)
        layers_meta.append((w_off, b_off, in_d, out_d))

    in_last = w_last.shape[1]
    wl_off = _add(w_last)            # (1, in_last) row
    bl_off = _add(b_last[None, :])   # (1, 1)

    slab = jnp.zeros((_round_up(row, 8), width), jnp.float32)
    for off, arr in sections:
        slab = slab.at[off:off + arr.shape[0], :arr.shape[1]].set(arr)

    meta = (tuple(layers_meta), (wl_off, bl_off, in_last))
    return slab, meta


def make_mlp_kernel(meta):
    layers, (wl_off, bl_off, in_last) = meta

    def kernel(x_ref, p_ref, o_ref):
        h = x_ref[...]                                           # (tb, in_dim) f32
        # Hidden layers: h @ W + b, ReLU.  All params are static, 8-aligned
        # slices of the single packed slab (one DMA; VMEM-resident across the
        # batch grid).
        for w_off, b_off, in_d, out_d in layers:
            w = p_ref[w_off:w_off + in_d, 0:out_d]               # (in_d, out_d)
            b = p_ref[b_off:b_off + 1, 0:out_d]                  # (1, out_d)
            h = jnp.maximum(
                jnp.dot(h, w, preferred_element_type=jnp.float32) + b, 0.0)
        # Final Linear (OUTPUT_DIM == 1): VPU multiply + lane reduction instead
        # of a degenerate N=1 MXU matmul; store lane-dense as a (1, tb) row.
        w_row = p_ref[wl_off:wl_off + 1, 0:in_last]              # (1, in_last)
        b_out = p_ref[bl_off:bl_off + 1, 0:1]                    # (1, 1)
        y = jnp.sum(h * w_row, axis=-1, keepdims=True) + b_out   # (tb, 1)
        o_ref[...] = y.T.astype(o_ref.dtype)                     # (1, tb) lane-dense

    return kernel


@functools.partial(jax.jit, static_argnames=("meta", "block_batch"))
def net_forward(x, slab, *, meta, block_batch=512):
    """Forward pass of Net.  x: (batch, INPUT_DIM) f32.  Returns (batch, 1)."""
    batch, in_dim = x.shape

    if batch > block_batch:
        # Multi-step grid: tile must be a lane multiple (128) for the lane-dense
        # (1, tb) output block, and a sublane multiple (8) for the input block.
        tb = _round_up(block_batch, 128)
        padded = _round_up(batch, tb)
    else:
        # Single-step grid: the block equals the full (padded) array, only the
        # sublane (8) alignment of the input tile matters.
        tb = _round_up(batch, 8)
        padded = tb

    if padded != batch:
        x = jnp.pad(x, ((0, padded - batch), (0, 0)))  # zero rows: harmless compute

    grid = (padded // tb,)

    out_row = pl.pallas_call(
        make_mlp_kernel(meta),
        out_shape=jax.ShapeDtypeStruct((1, padded), x.dtype),
        grid=grid,
        in_specs=[
            pl.BlockSpec((tb, in_dim), lambda i: (i, 0)),   # batch tile of x
            pl.BlockSpec(slab.shape, lambda i: (0, 0)),     # packed params, resident
        ],
        out_specs=pl.BlockSpec((1, tb), lambda i: (0, i)),  # lane-dense output row
        compiler_params=pltpu.CompilerParams(
            dimension_semantics=("parallel",)),             # both TCs on v7x
    )(x, slab)
    # Layout plumbing only: present the result in nn.Linear's (batch, 1) shape.
    return out_row[:, :batch].reshape(batch, 1)


def init_params(key, input_dim, hidden_dims, output_dim=1):
    """Deterministic synthetic init matching nn.Linear shapes: W (out, in), b (out,)."""
    dims = [input_dim] + list(hidden_dims) + [output_dim]
    params = []
    for i in range(len(dims) - 1):
        key, kw, kb = jax.random.split(key, 3)
        fan_in = dims[i]
        bound = 1.0 / (fan_in ** 0.5)
        w = jax.random.uniform(kw, (dims[i + 1], dims[i]), jnp.float32, -bound, bound)
        b = jax.random.uniform(kb, (dims[i + 1],), jnp.float32, -bound, bound)
        params.append((w, b))
    return params


def reference_forward(x, params):
    h = x
    for w, b in params[:-1]:
        h = jnp.maximum(h @ w.T + b, 0.0)
    w, b = params[-1]
    return h @ w.T + b


if __name__ == "__main__":
    INPUT_DIM = 16
    HIDDEN_DIM_LST = [32, 32]
    OUTPUT_DIM = 1
    BATCH = 8

    key = jax.random.PRNGKey(0)
    key, kx = jax.random.split(key)
    x = jax.random.normal(kx, (BATCH, INPUT_DIM), jnp.float32)
    params = init_params(key, INPUT_DIM, HIDDEN_DIM_LST, OUTPUT_DIM)

    # One-time: pre-transpose + pack all parameters into a single slab.
    slab, meta = pack_params(params)

    out = net_forward(x, slab, meta=meta)
    out = jax.block_until_ready(out)
    ref = reference_forward(x, params)
    assert out.shape == (BATCH, OUTPUT_DIM)
    assert jnp.allclose(out, ref, atol=1e-5, rtol=1e-5)

    # Exercise the tiled + ragged-batch path (padding to a 128-multiple tile).
    key, kx2 = jax.random.split(key)
    x2 = jax.random.normal(kx2, (200, INPUT_DIM), jnp.float32)
    out2 = jax.block_until_ready(net_forward(x2, slab, meta=meta, block_batch=128))
    ref2 = reference_forward(x2, params)
    assert out2.shape == (200, OUTPUT_DIM)
    assert jnp.allclose(out2, ref2, atol=1e-5, rtol=1e-5)

    print("KERNEL_OK")
</pallas_src>

<mosaic_0001>
module attributes {stable_mosaic.version = 11 : i64} {
  func.func @kernel(%arg0: i32, %arg1: memref<8x16xf32, #tpu.memory_space<vmem>>, %arg2: memref<80x32xf32, #tpu.memory_space<vmem>>, %arg3: memref<1x8xf32, #tpu.memory_space<vmem>>) attributes {dimension_semantics = [#tpu.dimension_semantics<parallel>], iteration_bounds = array<i64: 1>, scalar_prefetch = 0 : i64, scratch_operands = 0 : i64, tpu.core_type = #tpu.core_type<tc>, window_params = [{transform_indices = @transform_0, window_bounds = array<i64: 8, 16>}, {pipeline_mode = #tpu.pipeline_mode<synchronous>, transform_indices = @transform_1, window_bounds = array<i64: 80, 32>}, {transform_indices = @transform_2, window_bounds = array<i64: 1, 8>}]} {
    %c0 = arith.constant 0 : index
    %c0_0 = arith.constant 0 : index
    %0 = vector.load %arg1[%c0, %c0_0] : memref<8x16xf32, #tpu.memory_space<vmem>>, vector<8x16xf32>
    %c0_1 = arith.constant 0 : index
    %c0_2 = arith.constant 0 : index
    %1 = vector.load %arg2[%c0_1, %c0_2] : memref<80x32xf32, #tpu.memory_space<vmem>>, vector<16x32xf32>
    %c16 = arith.constant 16 : index
    %c0_3 = arith.constant 0 : index
    %2 = vector.load %arg2[%c16, %c0_3] : memref<80x32xf32, #tpu.memory_space<vmem>>, vector<1x32xf32>
    %cst = arith.constant dense<0.000000e+00> : vector<8x32xf32>
    %3 = tpu.matmul %0, %1, %cst {dimension_numbers = #tpu.dot_dimension_numbers<[1], [0], [0], [1], [0, 0, 1, 1], [], []>} : vector<8x16xf32>, vector<16x32xf32>, vector<8x32xf32> -> vector<8x32xf32>
    %4 = vector.broadcast %2 : vector<1x32xf32> to vector<8x32xf32>
    %5 = arith.addf %3, %4 : vector<8x32xf32>
    %cst_4 = arith.constant 0.000000e+00 : f32
    %6 = vector.broadcast %cst_4 : f32 to vector<8x32xf32>
    %7 = arith.maximumf %5, %6 : vector<8x32xf32>
    %c24 = arith.constant 24 : index
    %c0_5 = arith.constant 0 : index
    %8 = vector.load %arg2[%c24, %c0_5] : memref<80x32xf32, #tpu.memory_space<vmem>>, vector<32x32xf32>
    %c56 = arith.constant 56 : index
    %c0_6 = arith.constant 0 : index
    %9 = vector.load %arg2[%c56, %c0_6] : memref<80x32xf32, #tpu.memory_space<vmem>>, vector<1x32xf32>
    %cst_7 = arith.constant dense<0.000000e+00> : vector<8x32xf32>
    %10 = tpu.matmul %7, %8, %cst_7 {dimension_numbers = #tpu.dot_dimension_numbers<[1], [0], [0], [1], [0, 0, 1, 1], [], []>} : vector<8x32xf32>, vector<32x32xf32>, vector<8x32xf32> -> vector<8x32xf32>
    %11 = vector.broadcast %9 : vector<1x32xf32> to vector<8x32xf32>
    %12 = arith.addf %10, %11 : vector<8x32xf32>
    %cst_8 = arith.constant 0.000000e+00 : f32
    %13 = vector.broadcast %cst_8 : f32 to vector<8x32xf32>
    %14 = arith.maximumf %12, %13 : vector<8x32xf32>
    %c64 = arith.constant 64 : index
    %c0_9 = arith.constant 0 : index
    %15 = vector.load %arg2[%c64, %c0_9] : memref<80x32xf32, #tpu.memory_space<vmem>>, vector<1x32xf32>
    %c72 = arith.constant 72 : index
    %c0_10 = arith.constant 0 : index
    %16 = vector.load %arg2[%c72, %c0_10] : memref<80x32xf32, #tpu.memory_space<vmem>>, vector<1x1xf32>
    %17 = vector.broadcast %15 : vector<1x32xf32> to vector<8x32xf32>
    %18 = arith.mulf %14, %17 : vector<8x32xf32>
    %cst_11 = arith.constant dense<0.000000e+00> : vector<8xf32>
    %19 = vector.multi_reduction <add>, %18, %cst_11 [1] : vector<8x32xf32> to vector<8xf32>
    %20 = vector.shape_cast %19 : vector<8xf32> to vector<8x1xf32>
    %21 = vector.broadcast %16 : vector<1x1xf32> to vector<8x1xf32>
    %22 = arith.addf %20, %21 : vector<8x1xf32>
    %23 = tpu.transpose %22, [1, 0] : vector<8x1xf32> -> vector<1x8xf32>
    %c0_12 = arith.constant 0 : index
    %c0_13 = arith.constant 0 : index
    %24 = vector.load %arg3[%c0_12, %c0_13] : memref<1x8xf32, #tpu.memory_space<vmem>>, vector<1x8xf32>
    tpu.vector_store %arg3[%c0_12, %c0_13], %23 {strides = array<i32>} : memref<1x8xf32, #tpu.memory_space<vmem>>, vector<1x8xf32>,
    return
  }
  func.func @transform_0(%arg0: i32) -> (i32, i32) {
    %c0_i32 = arith.constant 0 : i32
    %c0_i32_0 = arith.constant 0 : i32
    return %arg0, %c0_i32 : i32, i32
  }
  func.func @transform_1(%arg0: i32) -> (i32, i32) {
    %c0_i32 = arith.constant 0 : i32
    %c0_i32_0 = arith.constant 0 : i32
    %c0_i32_1 = arith.constant 0 : i32
    return %c0_i32, %c0_i32_0 : i32, i32
  }
  func.func @transform_2(%arg0: i32) -> (i32, i32) {
    %c0_i32 = arith.constant 0 : i32
    %c0_i32_0 = arith.constant 0 : i32
    return %c0_i32, %arg0 : i32, i32
  }
}

</mosaic_0001>

<llo_original>
// kernel: net_forward.1
$region0: #{net_forward.1}
  #allocation0 [shape = 'u32[]', space=smem, size = 0x4, offset = 0x4, fixed_abs, tag = 'smem constant byte address 0x4 - core index']
  #allocation1 [shape = 'u32[144,128]{1,0:T(1,128)}', space=vmem, size = 0x12000, scoped, tag = 'internal scratch']
  %s0 = inlined_call_operand.vmem [shape: f32[8,16], index: 0, kind: input, shape index: {}]
  %s1 = inlined_call_operand.vmem [shape: f32[80,32], index: 1, kind: input, shape index: {}]
  %s2 = inlined_call_operand.hbm [shape: f32[1,8], index: 2, kind: output, shape index: {}]
  %s3 = sld [smem:[#allocation0]]
  $region18: #{net_forward.1} parent=0
    _
  %s5 = ssub.s32 1, %s3
  %s6 = scalar_select 0, %s5, %s3
  $region1: #{net_forward.1} parent=0
    #allocation2 [shape = 'u8[512]{0}', space=vmem, size = 0x400, scoped, tag = 'output window, operand 0, single buffered']
    #allocation3 [shape = 's32[1]{0}', space=sflag, size = 0x4, scoped, tag = 'scoped memory for net_forward.1']
    %7 = vsyncpa [#allocation3], 0
    // Predicated region
    $region2: #{net_forward.1} parent=1 // pred_check
      _
    $region3: #{net_forward.1} parent=1 // pred_check_branch
      %9 = sbr.rel (0) target = $region5
    $region4: #{net_forward.1} parent=1 // pred_region
      _
    $region5: #{net_forward.1} parent=1 // pred_fallthru
      _
    // Predicated region
    $region6: #{net_forward.1} parent=1 // pred_check
      _
    $region7: #{net_forward.1} parent=1 // pred_check_branch
      %11 = sbr.rel (0) target = $region9
    $region8: #{net_forward.1} parent=1 // pred_region
      _
    $region9: #{net_forward.1} parent=1 // pred_fallthru
      _
    %v12 = vld [vmem:[%s0] sm:$0xff]
    %v13 = vld [vmem:[%s1] sm:$0xff]
    %v14 = vld [vmem:[%s1 + $0x8] sm:$0xff]
    %v15 = vld [vmem:[%s1 + $0x10] sm:$0x1]
    %v16 = vlaneseq
    %v17 = vshrl.u32 %v16, 7
    %v18 = vsub.s32 0, %v17
    %v19 = vrot.slane %v15, %v18
    %vm20 = vcmask 130048
    %v22 = vsel %vm20, %v12, 0
    %24 = vmatprep.subr.mxu0 0.0
    %25 = vmatpush1.msra.mxu0 %v13
    %26 = vmatprep.subr.mxu0 0.0
    %27 = vmatpush1.msra.mxu0 %v14
    %28 = vmatprep.subr.mxu0 0.0
    %29 = vmatpush1.msra.mxu0 0.0
    %30 = vmatprep.subr.mxu0 0.0
    %31 = vmatpush1.msra.mxu0 0.0
    %32 = vmatprep.subr.mxu0 0.0
    %33 = vmatpush1.msra.mxu0 0.0
    %34 = vmatprep.subr.mxu0 0.0
    %35 = vmatpush1.msra.mxu0 0.0
    %36 = vmatprep.subr.mxu0 0.0
    %37 = vmatpush1.msra.mxu0 0.0
    %38 = vmatprep.subr.mxu0 0.0
    %39 = vmatpush1.msra.mxu0 0.0
    %40 = vmatprep.subr.mxu0 0.0
    %41 = vmatpush1.msra.mxu0 0.0
    %42 = vmatprep.subr.mxu0 0.0
    %43 = vmatpush1.msra.mxu0 0.0
    %44 = vmatprep.subr.mxu0 0.0
    %45 = vmatpush1.msra.mxu0 0.0
    %46 = vmatprep.subr.mxu0 0.0
    %47 = vmatpush1.msra.mxu0 0.0
    %48 = vmatprep.subr.mxu0 0.0
    %49 = vmatpush1.msra.mxu0 0.0
    %50 = vmatprep.subr.mxu0 0.0
    %51 = vmatpush1.msra.mxu0 0.0
    %52 = vmatprep.subr.mxu0 0.0
    %53 = vmatpush1.msra.mxu0 0.0
    %54 = vmatprep.subr.mxu0 0.0
    %55 = vmatpush1.msra.mxu0 0.0
    %56 = vmatprep.subr.mxu0 0.0
    %57 = vmatpush1.msra.mxu0 0.0
    %58 = vmatprep.subr.mxu0 0.0
    %59 = vmatpush1.msra.mxu0 0.0
    %60 = vmatprep.subr.mxu0 0.0
    %61 = vmatpush1.msra.mxu0 0.0
    %62 = vmatprep.subr.mxu0 0.0
    %63 = vmatpush1.msra.mxu0 0.0
    %64 = vmatprep.subr.mxu0 0.0
    %65 = vmatpush1.msra.mxu0 0.0
    %66 = vmatprep.subr.mxu0 0.0
    %67 = vmatpush1.msra.mxu0 0.0
    %68 = vmatprep.subr.mxu0 0.0
    %69 = vmatpush1.msra.mxu0 0.0
    %70 = vmatprep.subr.mxu0 0.0
    %71 = vmatpush1.msra.mxu0 0.0
    %72 = vmatprep.subr.mxu0 0.0
    %73 = vmatpush1.msra.mxu0 0.0
    %74 = vmatprep.subr.mxu0 0.0
    %75 = vmatpush1.msra.mxu0 0.0
    %76 = vmatprep.subr.mxu0 0.0
    %77 = vmatpush1.msra.mxu0 0.0
    %78 = vmatprep.subr.mxu0 0.0
    %79 = vmatpush1.msra.mxu0 0.0
    %80 = vmatprep.subr.mxu0 0.0
    %81 = vmatpush1.msra.mxu0 0.0
    %82 = vmatprep.subr.mxu0 0.0
    %83 = vmatpush1.msra.mxu0 0.0
    %84 = vmatprep.subr.mxu0 0.0
    %85 = vmatpush1.msra.mxu0 0.0
    %86 = vmatprep.subr.mxu0 0.0
    %87 = vmatpush1.msra.mxu0 0.0
    %88 = vmatprep.mubr.f32.mxu0 0.0
    %89 = vmatmul.mubr.f32.gmra.mrb[0].mxu0 %v22
    %v90 = vpop.f32.mrb[0].mxu0
    %v91 = vadd.f32 %v19, %v90
    %v92 = vpop.f32.mrb[0].mxu0
    %93 = vdwg.mxu0
    %v94 = vmax.f32 %v91, 0.0
    %v95 = vld [vmem:[%s1 + $0x18] sm:$0xff]
    %v96 = vld [vmem:[%s1 + $0x20] sm:$0xff]
    %v97 = vld [vmem:[%s1 + $0x28] sm:$0xff]
    %v98 = vld [vmem:[%s1 + $0x30] sm:$0xff]
    %v99 = vld [vmem:[%s1 + $0x38] sm:$0x1]
    %v100 = vlaneseq
    %v101 = vshrl.u32 %v100, 7
    %v102 = vsub.s32 0, %v101
    %v103 = vrot.slane %v99, %v102
    %vm104 = vcmask 261120
    %v106 = vsel %vm104, %v94, 0
    %108 = vmatprep.subr.mxu0 0.0
    %109 = vmatpush1.msra.mxu0 %v95
    %110 = vmatprep.subr.mxu0 0.0
    %111 = vmatpush1.msra.mxu0 %v96
    %112 = vmatprep.subr.mxu0 0.0
    %113 = vmatpush1.msra.mxu0 %v97
    %114 = vmatprep.subr.mxu0 0.0
    %115 = vmatpush1.msra.mxu0 %v98
    %116 = vmatprep.subr.mxu0 0.0
    %117 = vmatpush1.msra.mxu0 0.0
    %118 = vmatprep.subr.mxu0 0.0
    %119 = vmatpush1.msra.mxu0 0.0
    %120 = vmatprep.subr.mxu0 0.0
    %121 = vmatpush1.msra.mxu0 0.0
    %122 = vmatprep.subr.mxu0 0.0
    %123 = vmatpush1.msra.mxu0 0.0
    %124 = vmatprep.subr.mxu0 0.0
    %125 = vmatpush1.msra.mxu0 0.0
    %126 = vmatprep.subr.mxu0 0.0
    %127 = vmatpush1.msra.mxu0 0.0
    %128 = vmatprep.subr.mxu0 0.0
    %129 = vmatpush1.msra.mxu0 0.0
    %130 = vmatprep.subr.mxu0 0.0
    %131 = vmatpush1.msra.mxu0 0.0
    %132 = vmatprep.subr.mxu0 0.0
    %133 = vmatpush1.msra.mxu0 0.0
    %134 = vmatprep.subr.mxu0 0.0
    %135 = vmatpush1.msra.mxu0 0.0
    %136 = vmatprep.subr.mxu0 0.0
    %137 = vmatpush1.msra.mxu0 0.0
    %138 = vmatprep.subr.mxu0 0.0
    %139 = vmatpush1.msra.mxu0 0.0
    %140 = vmatprep.subr.mxu0 0.0
    %141 = vmatpush1.msra.mxu0 0.0
    %142 = vmatprep.subr.mxu0 0.0
    %143 = vmatpush1.msra.mxu0 0.0
    %144 = vmatprep.subr.mxu0 0.0
    %145 = vmatpush1.msra.mxu0 0.0
    %146 = vmatprep.subr.mxu0 0.0
    %147 = vmatpush1.msra.mxu0 0.0
    %148 = vmatprep.subr.mxu0 0.0
    %149 = vmatpush1.msra.mxu0 0.0
    %150 = vmatprep.subr.mxu0 0.0
    %151 = vmatpush1.msra.mxu0 0.0
    %152 = vmatprep.subr.mxu0 0.0
    %153 = vmatpush1.msra.mxu0 0.0
    %154 = vmatprep.subr.mxu0 0.0
    %155 = vmatpush1.msra.mxu0 0.0
    %156 = vmatprep.subr.mxu0 0.0
    %157 = vmatpush1.msra.mxu0 0.0
    %158 = vmatprep.subr.mxu0 0.0
    %159 = vmatpush1.msra.mxu0 0.0
    %160 = vmatprep.subr.mxu0 0.0
    %161 = vmatpush1.msra.mxu0 0.0
    %162 = vmatprep.subr.mxu0 0.0
    %163 = vmatpush1.msra.mxu0 0.0
    %164 = vmatprep.subr.mxu0 0.0
    %165 = vmatpush1.msra.mxu0 0.0
    %166 = vmatprep.subr.mxu0 0.0
    %167 = vmatpush1.msra.mxu0 0.0
    %168 = vmatprep.subr.mxu0 0.0
    %169 = vmatpush1.msra.mxu0 0.0
    %170 = vmatprep.subr.mxu0 0.0
    %171 = vmatpush1.msra.mxu0 0.0
    %172 = vmatprep.mubr.f32.mxu0 0.0
    %173 = vmatmul.mubr.f32.gmra.mrb[0].mxu0 %v106
    %v174 = vpop.f32.mrb[0].mxu0
    %v175 = vadd.f32 %v103, %v174
    %v176 = vpop.f32.mrb[0].mxu0
    %177 = vdwg.mxu0
    %v178 = vmax.f32 %v175, 0.0
    %v179 = vld [vmem:[%s1 + $0x40] sm:$0x1]
    %v180 = vld [vmem:[%s1 + $0x48] sm:$0x1]
    %v181 = vlaneseq
    %v182 = vshrl.u32 %v181, 7
    %v183 = vsub.s32 0, %v182
    %v184 = vrot.slane %v179, %v183
    %v185 = vmul.f32 %v178, %v184
    %v186 = vsel %vm104, %v185, 0.0
    %187 = vadd.xlane.f32.xlu0 %v186
    %v188 = vpop.xlane.xlu0 %187
    %v189 = vlaneseq
    %v190 = vshrl.u32 %v189, 7
    %v191 = vsub.s32 0, %v190
    %v192 = vrot.slane %v180, %v191
    %v193 = vadd.f32 %v188, %v192
    %194 = vxpose.xlu0.b32.start [1/16] %v193, 128
    %195 = vxpose.xlu0.b32.cont [2/16] 0.0, 128
    %196 = vxpose.xlu0.b32.cont [3/16] 0.0, 128
    %197 = vxpose.xlu0.b32.cont [4/16] 0.0, 128
    %198 = vxpose.xlu0.b32.cont [5/16] 0.0, 128
    %199 = vxpose.xlu0.b32.cont [6/16] 0.0, 128
    %200 = vxpose.xlu0.b32.cont [7/16] 0.0, 128
    %201 = vxpose.xlu0.b32.cont [8/16] 0.0, 128
    %202 = vxpose.xlu0.b32.cont [9/16] 0.0, 128
    %203 = vxpose.xlu0.b32.cont [10/16] 0.0, 128
    %204 = vxpose.xlu0.b32.cont [11/16] 0.0, 128
    %205 = vxpose.xlu0.b32.cont [12/16] 0.0, 128
    %206 = vxpose.xlu0.b32.cont [13/16] 0.0, 128
    %207 = vxpose.xlu0.b32.cont [14/16] 0.0, 128
    %208 = vxpose.xlu0.b32.cont [15/16] 0.0, 128
    %209 = vxpose.xlu0.b32.end [16/16] 0.0, 128
    %v210 = vpop.trf.xlu0
    %v211 = vpop.trf.xlu0
    %v212 = vpop.trf.xlu0
    %v213 = vpop.trf.xlu0
    %v214 = vpop.trf.xlu0
    %v215 = vpop.trf.xlu0
    %v216 = vpop.trf.xlu0
    %v217 = vpop.trf.xlu0
    %v218 = vpop.trf.xlu0
    %v219 = vpop.trf.xlu0
    %v220 = vpop.trf.xlu0
    %v221 = vpop.trf.xlu0
    %v222 = vpop.trf.xlu0
    %v223 = vpop.trf.xlu0
    %v224 = vpop.trf.xlu0
    %v225 = vpop.trf.xlu0
    %vm226 = vcmask 57344
    %227 = vst.msk [vmem:[#allocation2] sm:$0x1] %vm226, %v210
    // Predicated region
    $region10: #{net_forward.1} parent=1 // pred_check
      _
    $region11: #{net_forward.1} parent=1 // pred_check_branch
      %229 = sbr.rel (0) target = $region13
    $region12: #{net_forward.1} parent=1 // pred_region
      %s231 = ssub.s32 16, 16
      %232 = vsyncadd [#allocation3], %s231
      %s234 = sshll.u32 [#allocation2], 4
      %s235 = int_to_ptr.vmem [resolvable:$true] %s234
      %237 = dma.vmem_to_hbm [thread:$0]  %s235, 16, %s2, [#allocation3]
    $region13: #{net_forward.1} parent=1 // pred_fallthru
      _
    // Predicated region
    $region14: #{net_forward.1} parent=1 // pred_check
      _
    $region15: #{net_forward.1} parent=1 // pred_check_branch
      %239 = sbr.rel (0) target = $region17
    $region16: #{net_forward.1} parent=1 // pred_region
      %240 = dma.done [#allocation3], 16
    $region17: #{net_forward.1} parent=1 // pred_fallthru
      _
    %241 = vsyncpa [#allocation3], 1

</llo_original>
